<compile_context>
chip_gen: v7x
topology: tpu7x:2x2x1
jax: 0.10.0
libtpu: 0.0.40
codegen_flags: <defaults>
</compile_context>

<pallas_src>
import functools
import math

import jax
import jax.numpy as jnp
from jax import lax
from jax.experimental import pallas as pl
from jax.experimental.pallas import tpu as pltpu


def _lcm(a, b):
    return a * b // math.gcd(a, b)


def _gcn_ffn_kernel(x_ref, a_ref, w_ref, b_ref, o_ref, *, n_chunks,
                    transform_first):
    """relu((A @ x) @ W + b) on one (N, t_tile*F) lane-flattened block.

    x_ref : (N, t_tile*F_in)    one batch element, t_tile time steps; (t, f)
                                flattened row-major into the lane dimension.
    a_ref : (N, N)              normalized adjacency (resident across steps).
    w_ref : (c_in, c_out)       I_{t_align} (x) W block-diagonal weight, so the
                                position-wise linear is a plain lane-aligned
                                2-D matmul (no reshape / broadcast in kernel).
    b_ref : (1, t_tile*F_out)   bias tiled per time step, f32.
    o_ref : (N, t_tile*F_out)   lane-dense output block.
    """
    x2 = x_ref[...]                      # native dtype -> MXU directly
    a = a_ref[...]
    c_in = w_ref.shape[0]
    c_out = w_ref.shape[1]

    if transform_first:
        # F_out < F_in: apply W first so node aggregation runs on the narrower
        # feature width (fewer MXU FLOPs on the aggregation).
        zs = [
            jnp.dot(x2[:, j * c_in:(j + 1) * c_in], w_ref[...],
                    preferred_element_type=jnp.float32)
            for j in range(n_chunks)
        ]
        z2 = zs[0] if n_chunks == 1 else jnp.concatenate(zs, axis=1)
        h = jnp.dot(a.astype(jnp.float32), z2,
                    preferred_element_type=jnp.float32)
        o_ref[...] = jnp.maximum(h + b_ref[...], 0.0).astype(o_ref.dtype)
    else:
        # Node aggregation: ONE streaming 2-D MXU matmul, lane-dense output,
        # f32 accumulation.
        h = jnp.dot(a, x2, preferred_element_type=jnp.float32)   # (N, t*F_in)
        w_f = w_ref[...].astype(jnp.float32)
        for j in range(n_chunks):
            z = jnp.dot(h[:, j * c_in:(j + 1) * c_in], w_f,
                        preferred_element_type=jnp.float32)       # (N, c_out)
            z = z + b_ref[:, j * c_out:(j + 1) * c_out]
            o_ref[:, j * c_out:(j + 1) * c_out] = (
                jnp.maximum(z, 0.0).astype(o_ref.dtype))


def position_wise_gcn_feed_forward(x, adj_norm, w, b, *, t_tile=None,
                                    vmem_limit_bytes=32 * 1024 * 1024):
    """
    x:        (B, N_nodes, T, F_in)
    adj_norm: (N_nodes, N_nodes)  symmetrically normalized adjacency
    w:        (F_in, F_out)
    b:        (F_out,)
    returns   (B, N_nodes, T, F_out) = relu((A_norm @ x) @ W + b)
    """
    B, N, T, F_in = x.shape
    F_out = w.shape[1]
    dt = x.dtype
    itemsize = jnp.dtype(dt).itemsize

    # Smallest time-chunk so both t*F_in and t*F_out are multiples of 128
    # (lane-dense loads AND stores).  Fall back to full-T blocks (always legal:
    # block dims equal to the full array dims) for awkward feature widths.
    t_align = _lcm(128 // math.gcd(F_in, 128), 128 // math.gcd(F_out, 128))
    if t_align > T or T % t_align != 0:
        t_align = T

    # Sanitize a user-provided tile; otherwise auto-size against a VMEM budget.
    if t_tile is not None and (t_tile <= 0 or T % t_tile != 0
                               or t_tile % t_align != 0):
        t_tile = None
    if t_tile is None:
        # Working-set budget per grid step, conservative for v7x (64 MiB
        # physical / 32 MiB scoped VMEM): double-buffered in/out blocks plus
        # one f32 intermediate per activation slab; A/W/bias are tiny and
        # resident.  v5e/v6e (128 MiB VMEM) fit this comfortably as well.
        budget = 12 * 1024 * 1024
        bytes_per_t = N * (F_in + F_out) * (2 * itemsize + 4)
        max_t = max(t_align, budget // max(bytes_per_t, 1))
        cands = [t for t in range(t_align, T + 1, t_align)
                 if T % t == 0 and t <= max_t]
        t_tile = max(cands) if cands else t_align
        # Keep >= 2 total grid steps when possible (v7x shards the parallel
        # grid axes over its 2 TensorCores).
        if B * (T // t_tile) < 2:
            smaller = [t for t in cands if B * (T // t) >= 2]
            if smaller:
                t_tile = max(smaller)

    n_chunks = max(1, t_tile // t_align)
    c_in = t_align * F_in
    c_out = t_align * F_out
    transform_first = F_out < F_in

    # Free layout changes only (contiguous trailing-dim merges — no transpose,
    # no extra HBM pass): (B, N, T, F) -> (B, N, T*F).
    x_flat = x.reshape(B, N, T * F_in)
    a_c = adj_norm.astype(dt)
    # Block-diagonal weight I_{t_align} (x) W: the position-wise linear becomes
    # a lane-aligned 2-D matmul per 128-multiple lane chunk (no in-kernel
    # reshape / broadcast_to).  Small: (t_align*F_in, t_align*F_out).
    w_blk = jnp.kron(jnp.eye(t_align, dtype=w.dtype), w).astype(dt)
    b_tiled = jnp.tile(b.astype(jnp.float32).reshape(1, F_out), (1, t_tile))

    kernel = functools.partial(_gcn_ffn_kernel, n_chunks=n_chunks,
                               transform_first=transform_first)

    grid = (B, T // t_tile)
    out = pl.pallas_call(
        kernel,
        out_shape=jax.ShapeDtypeStruct((B, N, T * F_out), dt),
        grid=grid,
        in_specs=[
            # x block: one batch element, all nodes, t_tile time steps
            # flattened into lanes (multiple of 128 by construction).
            pl.BlockSpec((None, N, t_tile * F_in), lambda bi, ti: (bi, 0, ti)),
            pl.BlockSpec((N, N), lambda bi, ti: (0, 0)),              # adjacency
            pl.BlockSpec((c_in, c_out), lambda bi, ti: (0, 0)),       # I (x) W
            pl.BlockSpec((1, t_tile * F_out), lambda bi, ti: (0, 0)),  # bias
        ],
        out_specs=pl.BlockSpec((None, N, t_tile * F_out),
                               lambda bi, ti: (bi, 0, ti)),
        compiler_params=pltpu.CompilerParams(
            dimension_semantics=("parallel", "parallel"),
            vmem_limit_bytes=vmem_limit_bytes,
        ),
    )(x_flat, a_c, w_blk, b_tiled)

    # (B, N, T*F_out) -> (B, N, T, F_out): free trailing-dim split.
    return out.reshape(B, N, T, F_out)


def sym_norm_adjacency(adj):
    """D^{-1/2} (A + I) D^{-1/2}."""
    n = adj.shape[0]
    a_hat = adj + jnp.eye(n, dtype=adj.dtype)
    deg = jnp.sum(a_hat, axis=-1)
    d_inv_sqrt = 1.0 / jnp.sqrt(deg)
    return a_hat * d_inv_sqrt[:, None] * d_inv_sqrt[None, :]


if __name__ == "__main__":
    # Small shapes consistent with (batch, N_nodes, T, F_in).
    B, N_NODES, T_IN, F_IN, F_OUT = 2, 8, 16, 32, 32

    key = jax.random.PRNGKey(0)
    k_x, k_a, k_w, k_b = jax.random.split(key, 4)

    x = jax.random.normal(k_x, (B, N_NODES, T_IN, F_IN), dtype=jnp.float32)

    # Deterministic small undirected graph, symmetrically normalized.
    upper = jax.random.bernoulli(k_a, 0.4, (N_NODES, N_NODES)).astype(jnp.float32)
    adj = jnp.triu(upper, 1)
    adj = adj + adj.T
    adj_norm = sym_norm_adjacency(adj)

    w = jax.random.normal(k_w, (F_IN, F_OUT), dtype=jnp.float32) / jnp.sqrt(F_IN)
    b = 0.1 * jax.random.normal(k_b, (F_OUT,), dtype=jnp.float32)

    y = position_wise_gcn_feed_forward(x, adj_norm, w, b)
    y = jax.block_until_ready(y)

    # Pure-JAX reference: dropout(relu((A_norm @ x) @ W + b)) with p = 0.
    h_ref = jnp.einsum("mn,bntf->bmtf", adj_norm, x,
                       precision=lax.Precision.HIGHEST)
    z_ref = jnp.einsum("bmtf,fo->bmto", h_ref, w,
                       precision=lax.Precision.HIGHEST) + b
    ref = jnp.maximum(z_ref, 0.0)

    assert y.shape == (B, N_NODES, T_IN, F_OUT), y.shape
    # Tolerance allows for MXU accumulation-order / precision differences.
    max_err = float(jnp.max(jnp.abs(y - ref)))
    assert jnp.allclose(y, ref, atol=5e-3, rtol=5e-3), f"mismatch, max_err={max_err}"

    print("KERNEL_OK")
</pallas_src>

<mosaic_0001>
module attributes {stable_mosaic.version = 11 : i64} {
  func.func @_gcn_ffn_kernel(%arg0: i32, %arg1: i32, %arg2: memref<1x8x512xf32, #tpu.memory_space<vmem>>, %arg3: memref<8x8xf32, #tpu.memory_space<vmem>>, %arg4: memref<128x128xf32, #tpu.memory_space<vmem>>, %arg5: memref<1x512xf32, #tpu.memory_space<vmem>>, %arg6: memref<1x8x512xf32, #tpu.memory_space<vmem>>) attributes {dimension_semantics = [#tpu.dimension_semantics<parallel>, #tpu.dimension_semantics<parallel>], iteration_bounds = array<i64: 2, 1>, scalar_prefetch = 0 : i64, scratch_operands = 0 : i64, tpu.core_type = #tpu.core_type<tc>, window_params = [{transform_indices = @transform_0, window_bounds = array<i64: 1, 8, 512>}, {pipeline_mode = #tpu.pipeline_mode<synchronous>, transform_indices = @transform_1, window_bounds = array<i64: 8, 8>}, {pipeline_mode = #tpu.pipeline_mode<synchronous>, transform_indices = @transform_2, window_bounds = array<i64: 128, 128>}, {pipeline_mode = #tpu.pipeline_mode<synchronous>, transform_indices = @transform_3, window_bounds = array<i64: 1, 512>}, {transform_indices = @transform_4, window_bounds = array<i64: 1, 8, 512>}]} {
    %c0 = arith.constant 0 : index
    %c0_0 = arith.constant 0 : index
    %c0_1 = arith.constant 0 : index
    %0 = vector.load %arg2[%c0, %c0_0, %c0_1] : memref<1x8x512xf32, #tpu.memory_space<vmem>>, vector<1x8x512xf32>
    %1 = vector.shape_cast %0 : vector<1x8x512xf32> to vector<8x512xf32>
    %c0_2 = arith.constant 0 : index
    %c0_3 = arith.constant 0 : index
    %2 = vector.load %arg3[%c0_2, %c0_3] : memref<8x8xf32, #tpu.memory_space<vmem>>, vector<8x8xf32>
    %cst = arith.constant dense<0.000000e+00> : vector<8x512xf32>
    %3 = tpu.matmul %2, %1, %cst {dimension_numbers = #tpu.dot_dimension_numbers<[1], [0], [0], [1], [0, 0, 1, 1], [], []>} : vector<8x8xf32>, vector<8x512xf32>, vector<8x512xf32> -> vector<8x512xf32>
    %c0_4 = arith.constant 0 : index
    %c0_5 = arith.constant 0 : index
    %4 = vector.load %arg4[%c0_4, %c0_5] : memref<128x128xf32, #tpu.memory_space<vmem>>, vector<128x128xf32>
    %5 = vector.extract_strided_slice %3 {offsets = [0, 0], sizes = [8, 128], strides = [1, 1]} : vector<8x512xf32> to vector<8x128xf32>
    %cst_6 = arith.constant dense<0.000000e+00> : vector<8x128xf32>
    %6 = tpu.matmul %5, %4, %cst_6 {dimension_numbers = #tpu.dot_dimension_numbers<[1], [0], [0], [1], [0, 0, 1, 1], [], []>} : vector<8x128xf32>, vector<128x128xf32>, vector<8x128xf32> -> vector<8x128xf32>
    %c0_7 = arith.constant 0 : index
    %c0_8 = arith.constant 0 : index
    %7 = vector.load %arg5[%c0_7, %c0_8] : memref<1x512xf32, #tpu.memory_space<vmem>>, vector<1x128xf32>
    %8 = vector.broadcast %7 : vector<1x128xf32> to vector<8x128xf32>
    %9 = arith.addf %6, %8 : vector<8x128xf32>
    %cst_9 = arith.constant 0.000000e+00 : f32
    %10 = vector.broadcast %cst_9 : f32 to vector<8x128xf32>
    %11 = arith.maximumf %9, %10 : vector<8x128xf32>
    %c0_10 = arith.constant 0 : index
    %c0_11 = arith.constant 0 : index
    %c0_12 = arith.constant 0 : index
    %12 = vector.load %arg6[%c0_10, %c0_11, %c0_12] : memref<1x8x512xf32, #tpu.memory_space<vmem>>, vector<1x8x128xf32>
    %13 = vector.shape_cast %12 : vector<1x8x128xf32> to vector<8x128xf32>
    %14 = vector.shape_cast %11 : vector<8x128xf32> to vector<1x8x128xf32>
    tpu.vector_store %arg6[%c0_10, %c0_11, %c0_12], %14 {strides = array<i32>} : memref<1x8x512xf32, #tpu.memory_space<vmem>>, vector<1x8x128xf32>,
    %15 = vector.extract_strided_slice %3 {offsets = [0, 128], sizes = [8, 128], strides = [1, 1]} : vector<8x512xf32> to vector<8x128xf32>
    %cst_13 = arith.constant dense<0.000000e+00> : vector<8x128xf32>
    %16 = tpu.matmul %15, %4, %cst_13 {dimension_numbers = #tpu.dot_dimension_numbers<[1], [0], [0], [1], [0, 0, 1, 1], [], []>} : vector<8x128xf32>, vector<128x128xf32>, vector<8x128xf32> -> vector<8x128xf32>
    %c0_14 = arith.constant 0 : index
    %c128 = arith.constant 128 : index
    %17 = vector.load %arg5[%c0_14, %c128] : memref<1x512xf32, #tpu.memory_space<vmem>>, vector<1x128xf32>
    %18 = vector.broadcast %17 : vector<1x128xf32> to vector<8x128xf32>
    %19 = arith.addf %16, %18 : vector<8x128xf32>
    %cst_15 = arith.constant 0.000000e+00 : f32
    %20 = vector.broadcast %cst_15 : f32 to vector<8x128xf32>
    %21 = arith.maximumf %19, %20 : vector<8x128xf32>
    %c0_16 = arith.constant 0 : index
    %c0_17 = arith.constant 0 : index
    %c128_18 = arith.constant 128 : index
    %22 = vector.load %arg6[%c0_16, %c0_17, %c128_18] : memref<1x8x512xf32, #tpu.memory_space<vmem>>, vector<1x8x128xf32>
    %23 = vector.shape_cast %22 : vector<1x8x128xf32> to vector<8x128xf32>
    %24 = vector.shape_cast %21 : vector<8x128xf32> to vector<1x8x128xf32>
    tpu.vector_store %arg6[%c0_16, %c0_17, %c128_18], %24 {strides = array<i32>} : memref<1x8x512xf32, #tpu.memory_space<vmem>>, vector<1x8x128xf32>,
    %25 = vector.extract_strided_slice %3 {offsets = [0, 256], sizes = [8, 128], strides = [1, 1]} : vector<8x512xf32> to vector<8x128xf32>
    %cst_19 = arith.constant dense<0.000000e+00> : vector<8x128xf32>
    %26 = tpu.matmul %25, %4, %cst_19 {dimension_numbers = #tpu.dot_dimension_numbers<[1], [0], [0], [1], [0, 0, 1, 1], [], []>} : vector<8x128xf32>, vector<128x128xf32>, vector<8x128xf32> -> vector<8x128xf32>
    %c0_20 = arith.constant 0 : index
    %c256 = arith.constant 256 : index
    %27 = vector.load %arg5[%c0_20, %c256] : memref<1x512xf32, #tpu.memory_space<vmem>>, vector<1x128xf32>
    %28 = vector.broadcast %27 : vector<1x128xf32> to vector<8x128xf32>
    %29 = arith.addf %26, %28 : vector<8x128xf32>
    %cst_21 = arith.constant 0.000000e+00 : f32
    %30 = vector.broadcast %cst_21 : f32 to vector<8x128xf32>
    %31 = arith.maximumf %29, %30 : vector<8x128xf32>
    %c0_22 = arith.constant 0 : index
    %c0_23 = arith.constant 0 : index
    %c256_24 = arith.constant 256 : index
    %32 = vector.load %arg6[%c0_22, %c0_23, %c256_24] : memref<1x8x512xf32, #tpu.memory_space<vmem>>, vector<1x8x128xf32>
    %33 = vector.shape_cast %32 : vector<1x8x128xf32> to vector<8x128xf32>
    %34 = vector.shape_cast %31 : vector<8x128xf32> to vector<1x8x128xf32>
    tpu.vector_store %arg6[%c0_22, %c0_23, %c256_24], %34 {strides = array<i32>} : memref<1x8x512xf32, #tpu.memory_space<vmem>>, vector<1x8x128xf32>,
    %35 = vector.extract_strided_slice %3 {offsets = [0, 384], sizes = [8, 128], strides = [1, 1]} : vector<8x512xf32> to vector<8x128xf32>
    %cst_25 = arith.constant dense<0.000000e+00> : vector<8x128xf32>
    %36 = tpu.matmul %35, %4, %cst_25 {dimension_numbers = #tpu.dot_dimension_numbers<[1], [0], [0], [1], [0, 0, 1, 1], [], []>} : vector<8x128xf32>, vector<128x128xf32>, vector<8x128xf32> -> vector<8x128xf32>
    %c0_26 = arith.constant 0 : index
    %c384 = arith.constant 384 : index
    %37 = vector.load %arg5[%c0_26, %c384] : memref<1x512xf32, #tpu.memory_space<vmem>>, vector<1x128xf32>
    %38 = vector.broadcast %37 : vector<1x128xf32> to vector<8x128xf32>
    %39 = arith.addf %36, %38 : vector<8x128xf32>
    %cst_27 = arith.constant 0.000000e+00 : f32
    %40 = vector.broadcast %cst_27 : f32 to vector<8x128xf32>
    %41 = arith.maximumf %39, %40 : vector<8x128xf32>
    %c0_28 = arith.constant 0 : index
    %c0_29 = arith.constant 0 : index
    %c384_30 = arith.constant 384 : index
    %42 = vector.load %arg6[%c0_28, %c0_29, %c384_30] : memref<1x8x512xf32, #tpu.memory_space<vmem>>, vector<1x8x128xf32>
    %43 = vector.shape_cast %42 : vector<1x8x128xf32> to vector<8x128xf32>
    %44 = vector.shape_cast %41 : vector<8x128xf32> to vector<1x8x128xf32>
    tpu.vector_store %arg6[%c0_28, %c0_29, %c384_30], %44 {strides = array<i32>} : memref<1x8x512xf32, #tpu.memory_space<vmem>>, vector<1x8x128xf32>,
    return
  }
  func.func @transform_0(%arg0: i32, %arg1: i32) -> (i32, i32, i32) {
    %c0_i32 = arith.constant 0 : i32
    %c0_i32_0 = arith.constant 0 : i32
    return %arg0, %c0_i32, %arg1 : i32, i32, i32
  }
  func.func @transform_1(%arg0: i32, %arg1: i32) -> (i32, i32) {
    %c0_i32 = arith.constant 0 : i32
    %c0_i32_0 = arith.constant 0 : i32
    %c0_i32_1 = arith.constant 0 : i32
    return %c0_i32, %c0_i32_0 : i32, i32
  }
  func.func @transform_2(%arg0: i32, %arg1: i32) -> (i32, i32) {
    %c0_i32 = arith.constant 0 : i32
    %c0_i32_0 = arith.constant 0 : i32
    %c0_i32_1 = arith.constant 0 : i32
    return %c0_i32, %c0_i32_0 : i32, i32
  }
  func.func @transform_3(%arg0: i32, %arg1: i32) -> (i32, i32) {
    %c0_i32 = arith.constant 0 : i32
    %c0_i32_0 = arith.constant 0 : i32
    %c0_i32_1 = arith.constant 0 : i32
    return %c0_i32, %c0_i32_0 : i32, i32
  }
  func.func @transform_4(%arg0: i32, %arg1: i32) -> (i32, i32, i32) {
    %c0_i32 = arith.constant 0 : i32
    %c0_i32_0 = arith.constant 0 : i32
    return %arg0, %c0_i32, %arg1 : i32, i32, i32
  }
}

</mosaic_0001>

<llo_original>
// kernel: tpu_custom_call.1
$region0: #{tpu_custom_call.1}
  #allocation0 [shape = 'u32[]', space=smem, size = 0x4, offset = 0x4, fixed_abs, tag = 'smem constant byte address 0x4 - core index']
  #allocation1 [shape = 'u32[144,128]{1,0:T(1,128)}', space=vmem, size = 0x12000, scoped, tag = 'internal scratch']
  %s0 = inlined_call_operand.hbm [shape: f32[2,8,512], index: 0, kind: input, shape index: {}]
  %s1 = inlined_call_operand.hbm [shape: f32[8,8], index: 1, kind: input, shape index: {}]
  %s2 = inlined_call_operand.hbm [shape: f32[128,128], index: 2, kind: input, shape index: {}]
  %s3 = inlined_call_operand.vmem [shape: f32[1,512], index: 3, kind: input, shape index: {}]
  %s4 = inlined_call_operand.hbm [shape: f32[2,8,512], index: 4, kind: output, shape index: {}]
  %s5 = sld [smem:[#allocation0]]
  $region61: #{tpu_custom_call.1} parent=0
    _
  %s7 = ssub.s32 1, %s5
  %s8 = scalar_select 0, %s7, %s5
  $region1: #{tpu_custom_call.1} parent=0
    #allocation2 [shape = 'u8[32768]{0}', space=vmem, size = 0x8000, scoped, tag = 'input window, operand 0']
    #allocation3 [shape = 's32[2]{0}', space=sflag, size = 0x8, scoped, tag = 'scoped memory for tpu_custom_call.1']
    #allocation4 [shape = 's32[2]{0}', space=sflag, size = 0x8, scoped, tag = 'scoped memory for tpu_custom_call.1']
    #allocation5 [shape = 'u8[4096]{0}', space=vmem, size = 0x1000, scoped, tag = 'input window, operand 1, single buffered']
    #allocation6 [shape = 's32[1]{0}', space=sflag, size = 0x4, scoped, tag = 'scoped memory for tpu_custom_call.1']
    #allocation7 [shape = 'u8[65536]{0}', space=vmem, size = 0x10000, scoped, tag = 'input window, operand 2, single buffered']
    #allocation8 [shape = 'u8[32768]{0}', space=vmem, size = 0x8000, scoped, tag = 'output window, operand 0']
    %9 = vsyncpa [#allocation3], 0
    %s10 = scalar_lea.sflag [#allocation3], 1
    %11 = vsyncpa %s10, 0
    %12 = vsyncpa [#allocation6], 0
    %13 = vsyncpa [#allocation4], 0
    %s14 = scalar_lea.sflag [#allocation4], 1
    %15 = vsyncpa %s14, 0
    loop: start=0, step=1, limit=4
    $region2: #{tpu_custom_call.1} parent=1 // loop_pre_header
      _
    $region3: #{tpu_custom_call.1} parent=1 // loop_header
      %s17 = sphi 0, %s21
      %p18 = scmp.ge.s32.totalorder %s17, 4
      %s24 = sphi 0, %s36
      %s25 = sphi 0, %s32
      %s26 = sphi 0, %s24
      %s27 = sphi 0, %s25
      %s28 = sphi 0, %s26
      %s29 = sphi 0, %s27
      %s41 = sphi 0, %s43
      %s44 = sphi 0, %s41
      %s45 = sphi 0, %s44
      %s61 = sphi 0, %s45
      %s65 = sphi 0, %s65
      %s67 = sphi 0, %s65
      %s68 = sphi 0, %s67
      %s82 = sphi 0, %s68
      %s86 = sphi 0, %s86
      %s88 = sphi 0, %s86
      %s89 = sphi 0, %s88
      %s103 = sphi 0, %s89
      %s107 = sphi 0, %s107
      %s109 = sphi 0, %s107
      %s110 = sphi 0, %s109
      %s124 = sphi 0, %s110
      %s132 = sphi 0, %s134
      %s135 = sphi 0, %s132
      %s136 = sphi 0, %s135
      %s152 = sphi 0, %s136
    $region4: #{tpu_custom_call.1} parent=1 // loop_header_branch
      %20 = sbr.rel (%p18) target = $region8
    $region5: #{tpu_custom_call.1} parent=1 // loop_body
      %s22 = ssub.s32 %s17, 1
      %s23 = ssub.s32 %s17, 2
      %s30 = sadd.s32 1, %s25
      %p31 = scmp.ge.s32.totalorder %s30, 1
      %s32 = scalar_select %p31, 0, %s30
      %s33 = sadd.s32 1, %s24
      %s34 = scalar_select %p31, %s33, %s24
      %p35 = scmp.ge.s32.totalorder %s34, 2
      %s36 = scalar_select %p35, 0, %s34
      %s37 = ssub.s32 %s24, %s36
      %s38 = ssub.s32 %s25, %s32
      %s39 = sor.u32 %s37, %s38
      %p40 = scmp.eq.s32.totalorder %s39, 0
      %s42 = sadd.s32 %s41, 1
      %s43 = scalar_select %p40, %s41, %s42
      %p46 = pneg %p40
      %p47 = scmp.eq.s32.totalorder %s17, 1
      %p48 = por %p46, %p47
      %p49 = scmp.ne.s32.totalorder %s41, %s44
      %p50 = scmp.eq.s32.totalorder %s17, 0
      %p51 = por %p49, %p50
      %p52 = scmp.ne.s32.totalorder %s41, %s44
      %p53 = scmp.eq.s32.totalorder %s22, 1
      %p54 = por %p52, %p53
      %p55 = scmp.ne.s32.totalorder %s44, %s45
      %p56 = scmp.eq.s32.totalorder %s22, 0
      %p57 = por %p55, %p56
      %p58 = scmp.ne.s32.totalorder %s44, %s45
      %p59 = scmp.eq.s32.totalorder %s23, 1
      %p60 = por %p58, %p59
      %p62 = scmp.ne.s32.totalorder %s45, %s61
      %p63 = scmp.eq.s32.totalorder %s23, 0
      %p64 = por %p62, %p63
      %s66 = sadd.s32 %s65, 1
      %p69 = scmp.eq.s32.totalorder %s17, 1
      %p70 = scmp.ne.s32.totalorder %s65, %s67
      %p71 = scmp.eq.s32.totalorder %s17, 0
      %p72 = por %p70, %p71
      %p73 = scmp.ne.s32.totalorder %s65, %s67
      %p74 = scmp.eq.s32.totalorder %s22, 1
      %p75 = por %p73, %p74
      %p76 = scmp.ne.s32.totalorder %s67, %s68
      %p77 = scmp.eq.s32.totalorder %s22, 0
      %p78 = por %p76, %p77
      %p79 = scmp.ne.s32.totalorder %s67, %s68
      %p80 = scmp.eq.s32.totalorder %s23, 1
      %p81 = por %p79, %p80
      %p83 = scmp.ne.s32.totalorder %s68, %s82
      %p84 = scmp.eq.s32.totalorder %s23, 0
      %p85 = por %p83, %p84
      %s87 = sadd.s32 %s86, 1
      %p90 = scmp.eq.s32.totalorder %s17, 1
      %p91 = scmp.ne.s32.totalorder %s86, %s88
      %p92 = scmp.eq.s32.totalorder %s17, 0
      %p93 = por %p91, %p92
      %p94 = scmp.ne.s32.totalorder %s86, %s88
      %p95 = scmp.eq.s32.totalorder %s22, 1
      %p96 = por %p94, %p95
      %p97 = scmp.ne.s32.totalorder %s88, %s89
      %p98 = scmp.eq.s32.totalorder %s22, 0
      %p99 = por %p97, %p98
      %p100 = scmp.ne.s32.totalorder %s88, %s89
      %p101 = scmp.eq.s32.totalorder %s23, 1
      %p102 = por %p100, %p101
      %p104 = scmp.ne.s32.totalorder %s89, %s103
      %p105 = scmp.eq.s32.totalorder %s23, 0
      %p106 = por %p104, %p105
      %s108 = sadd.s32 %s107, 1
      %p111 = scmp.eq.s32.totalorder %s17, 1
      %p112 = scmp.ne.s32.totalorder %s107, %s109
      %p113 = scmp.eq.s32.totalorder %s17, 0
      %p114 = por %p112, %p113
      %p115 = scmp.ne.s32.totalorder %s107, %s109
      %p116 = scmp.eq.s32.totalorder %s22, 1
      %p117 = por %p115, %p116
      %p118 = scmp.ne.s32.totalorder %s109, %s110
      %p119 = scmp.eq.s32.totalorder %s22, 0
      %p120 = por %p118, %p119
      %p121 = scmp.ne.s32.totalorder %s109, %s110
      %p122 = scmp.eq.s32.totalorder %s23, 1
      %p123 = por %p121, %p122
      %p125 = scmp.ne.s32.totalorder %s110, %s124
      %p126 = scmp.eq.s32.totalorder %s23, 0
      %p127 = por %p125, %p126
      %s128 = ssub.s32 %s24, %s36
      %s129 = ssub.s32 %s25, %s32
      %s130 = sor.u32 %s128, %s129
      %p131 = scmp.eq.s32.totalorder %s130, 0
      %s133 = sadd.s32 %s132, 1
      %s134 = scalar_select %p131, %s132, %s133
      %p137 = pneg %p131
      %p138 = scmp.eq.s32.totalorder %s17, 1
      %p139 = por %p137, %p138
      %p140 = scmp.ne.s32.totalorder %s132, %s135
      %p141 = scmp.eq.s32.totalorder %s17, 0
      %p142 = por %p140, %p141
      %p143 = scmp.ne.s32.totalorder %s132, %s135
      %p144 = scmp.eq.s32.totalorder %s22, 1
      %p145 = por %p143, %p144
      %p146 = scmp.ne.s32.totalorder %s135, %s136
      %p147 = scmp.eq.s32.totalorder %s22, 0
      %p148 = por %p146, %p147
      %p149 = scmp.ne.s32.totalorder %s135, %s136
      %p150 = scmp.eq.s32.totalorder %s23, 1
      %p151 = por %p149, %p150
      %p153 = scmp.ne.s32.totalorder %s136, %s152
      %p154 = scmp.eq.s32.totalorder %s23, 0
      %p155 = por %p153, %p154
      %p156 = scmp.le.s32.totalorder 1, %s17
      %p157 = scmp.lt.s32.totalorder %s17, 3
      %p158 = pnand %p156, %p157
      %p159 = pneg %p158
      // Predicated region
      $region9: #{tpu_custom_call.1} parent=5 // pred_check
        _
      $region10: #{tpu_custom_call.1} parent=5 // pred_check_branch
        %161 = sbr.rel (%p158) target = $region12
      $region11: #{tpu_custom_call.1} parent=5 // pred_region
        %s162 = ssub.s32 %s17, 1
        // Predicated region
        $region13: #{tpu_custom_call.1} parent=11 // pred_check
          %p163 = pneg %p78
        $region14: #{tpu_custom_call.1} parent=11 // pred_check_branch
          %165 = sbr.rel (%p163) target = $region16
        $region15: #{tpu_custom_call.1} parent=11 // pred_region
          %s167 = ssub.s32 128, 128
          %168 = vsyncadd [#allocation6], %s167
          %s170 = sshll.u32 [#allocation5], 4
          %s171 = int_to_ptr.vmem [resolvable:$true] %s170
          %173 = dma.hbm_to_vmem [thread:$0]  %s1, 128, %s171, [#allocation6]
        $region16: #{tpu_custom_call.1} parent=11 // pred_fallthru
          _
        // Predicated region
        $region17: #{tpu_custom_call.1} parent=11 // pred_check
          %p174 = pneg %p99
        $region18: #{tpu_custom_call.1} parent=11 // pred_check_branch
          %176 = sbr.rel (%p174) target = $region20
        $region19: #{tpu_custom_call.1} parent=11 // pred_region
          %s178 = ssub.s32 2048, 2048
          %179 = vsyncadd [#allocation6], %s178
          %s180 = sshll.u32 [#allocation7], 4
          %s181 = int_to_ptr.vmem [resolvable:$true] %s180
          %186 = dma.hbm_to_vmem [thread:$0]  %s2, 2048, %s181, [#allocation6], 128, 128, 8
        $region20: #{tpu_custom_call.1} parent=11 // pred_fallthru
          _
        // Predicated region
        $region21: #{tpu_custom_call.1} parent=11 // pred_check
          %p187 = pneg %p120
        $region22: #{tpu_custom_call.1} parent=11 // pred_check_branch
          %189 = sbr.rel (%p187) target = $region24
        $region23: #{tpu_custom_call.1} parent=11 // pred_region
          _
        $region24: #{tpu_custom_call.1} parent=11 // pred_fallthru
          _
      $region12: #{tpu_custom_call.1} parent=5 // pred_fallthru
        _
      %p190 = scmp.lt.s32.totalorder %s17, 2
      // Predicated region
      $region25: #{tpu_custom_call.1} parent=5 // pred_check
        %p191 = pneg %p190
      $region26: #{tpu_custom_call.1} parent=5 // pred_check_branch
        %193 = sbr.rel (%p191) target = $region28
      $region27: #{tpu_custom_call.1} parent=5 // pred_region
        // Predicated region
        $region29: #{tpu_custom_call.1} parent=27 // pred_check
          %p194 = pneg %p51
        $region30: #{tpu_custom_call.1} parent=27 // pred_check_branch
          %196 = sbr.rel (%p194) target = $region32
        $region31: #{tpu_custom_call.1} parent=27 // pred_region
          %s197 = sand.u32 %s41, 1
          %s198 = scalar_lea.sflag [#allocation3], %s197
          %s199 = sand.u32 %s41, 1
          %s200 = smul.addr %s199, 32
          %s201 = scalar_lea.vmem [#allocation2], %s200
          %s202 = smul.u32 4, %s25
          %s204 = ssub.s32 512, 512
          %205 = vsyncadd %s198, %s204
          %s206 = smul.addr %s24, 4
          %s207 = sadd.s32 %s202, %s206
          %s208 = smul.addr %s207, 128
          %s209 = scalar_lea.hbm %s0, %s208
          %s211 = sshll.u32 %s201, 4
          %s212 = int_to_ptr.vmem [resolvable:$true] %s211
          %214 = dma.hbm_to_vmem [thread:$0]  %s209, 512, %s212, %s198
        $region32: #{tpu_custom_call.1} parent=27 // pred_fallthru
          _
      $region28: #{tpu_custom_call.1} parent=5 // pred_fallthru
        _
      %p215 = scmp.le.s32.totalorder 1, %s17
      %p216 = scmp.lt.s32.totalorder %s17, 3
      %p217 = pnand %p215, %p216
      %p218 = pneg %p217
      // Predicated region
      $region33: #{tpu_custom_call.1} parent=5 // pred_check
        _
      $region34: #{tpu_custom_call.1} parent=5 // pred_check_branch
        %220 = sbr.rel (%p217) target = $region36
      $region35: #{tpu_custom_call.1} parent=5 // pred_region
        %s221 = ssub.s32 %s17, 1
        %s222 = sand.u32 %s44, 1
        %s223 = scalar_lea.sflag [#allocation3], %s222
        %s224 = sand.u32 %s44, 1
        %s225 = smul.addr %s224, 32
        %s226 = scalar_lea.vmem [#allocation2], %s225
        // Predicated region
        $region37: #{tpu_custom_call.1} parent=35 // pred_check
          %p227 = pneg %p57
        $region38: #{tpu_custom_call.1} parent=35 // pred_check_branch
          %229 = sbr.rel (%p227) target = $region40
        $region39: #{tpu_custom_call.1} parent=35 // pred_region
          %230 = dma.done %s223, 512
        $region40: #{tpu_custom_call.1} parent=35 // pred_fallthru
          _
        // Predicated region
        $region41: #{tpu_custom_call.1} parent=35 // pred_check
          %p231 = pneg %p78
        $region42: #{tpu_custom_call.1} parent=35 // pred_check_branch
          %233 = sbr.rel (%p231) target = $region44
        $region43: #{tpu_custom_call.1} parent=35 // pred_region
          %234 = dma.done [#allocation6], 128
        $region44: #{tpu_custom_call.1} parent=35 // pred_fallthru
          _
        // Predicated region
        $region45: #{tpu_custom_call.1} parent=35 // pred_check
          %p235 = pneg %p99
        $region46: #{tpu_custom_call.1} parent=35 // pred_check_branch
          %237 = sbr.rel (%p235) target = $region48
        $region47: #{tpu_custom_call.1} parent=35 // pred_region
          %238 = dma.done [#allocation6], 2048
        $region48: #{tpu_custom_call.1} parent=35 // pred_fallthru
          _
        %s239 = sand.u32 %s44, 1
        %s240 = scalar_lea.sflag [#allocation3], %s239
        %s241 = sand.u32 %s44, 1
        %s242 = smul.addr %s241, 32
        %s243 = scalar_lea.vmem [#allocation2], %s242
        %p244 = pneg %p57
        %p245 = pneg %p54
        %p246 = pneg %p78
        %p247 = pneg %p75
        %p248 = pneg %p99
        %p249 = pneg %p96
        %p250 = pneg %p120
        %p251 = pneg %p117
        %p252 = pneg %p148
        %p253 = pneg %p145
        %s254 = sand.u32 %s135, 1
        %s255 = scalar_lea.sflag [#allocation4], %s254
        %s256 = sand.u32 %s135, 1
        %s257 = smul.addr %s256, 32
        %s258 = scalar_lea.vmem [#allocation8], %s257
        %s259 = smul.u32 4, %s27
        %s260 = smul.u32 4, %s27
        %v261 = vld [vmem:[%s226] sm:$0xff]
        %v262 = vld [vmem:[%s226 + $0x8] sm:$0xff]
        %v263 = vld [vmem:[%s226 + $0x10] sm:$0xff]
        %v264 = vld [vmem:[%s226 + $0x18] sm:$0xff]
        %v265 = vld [vmem:[#allocation5] sm:$0xff]
        %vm266 = vcmask 64512
        %v268 = vsel %vm266, %v265, 0
        %270 = vmatprep.subr.mxu0 %v262
        %271 = vmatpush1.msra.mxu0 %v261
        %272 = vmatprep.subr.mxu0 0.0
        %273 = vmatpush1.msra.mxu0 0.0
        %274 = vmatprep.subr.mxu0 0.0
        %275 = vmatpush1.msra.mxu0 0.0
        %276 = vmatprep.subr.mxu0 0.0
        %277 = vmatpush1.msra.mxu0 0.0
        %278 = vmatprep.subr.mxu0 0.0
        %279 = vmatpush1.msra.mxu0 0.0
        %280 = vmatprep.subr.mxu0 0.0
        %281 = vmatpush1.msra.mxu0 0.0
        %282 = vmatprep.subr.mxu0 0.0
        %283 = vmatpush1.msra.mxu0 0.0
        %284 = vmatprep.subr.mxu0 0.0
        %285 = vmatpush1.msra.mxu0 0.0
        %286 = vmatprep.subr.mxu0 0.0
        %287 = vmatpush1.msra.mxu0 0.0
        %288 = vmatprep.subr.mxu0 0.0
        %289 = vmatpush1.msra.mxu0 0.0
        %290 = vmatprep.subr.mxu0 0.0
        %291 = vmatpush1.msra.mxu0 0.0
        %292 = vmatprep.subr.mxu0 0.0
        %293 = vmatpush1.msra.mxu0 0.0
        %294 = vmatprep.subr.mxu0 0.0
        %295 = vmatpush1.msra.mxu0 0.0
        %296 = vmatprep.subr.mxu0 0.0
        %297 = vmatpush1.msra.mxu0 0.0
        %298 = vmatprep.subr.mxu0 0.0
        %299 = vmatpush1.msra.mxu0 0.0
        %300 = vmatprep.subr.mxu0 0.0
        %301 = vmatpush1.msra.mxu0 0.0
        %302 = vmatprep.subr.mxu0 0.0
        %303 = vmatpush1.msra.mxu0 0.0
        %304 = vmatprep.subr.mxu0 0.0
        %305 = vmatpush1.msra.mxu0 0.0
        %306 = vmatprep.subr.mxu0 0.0
        %307 = vmatpush1.msra.mxu0 0.0
        %308 = vmatprep.subr.mxu0 0.0
        %309 = vmatpush1.msra.mxu0 0.0
        %310 = vmatprep.subr.mxu0 0.0
        %311 = vmatpush1.msra.mxu0 0.0
        %312 = vmatprep.subr.mxu0 0.0
        %313 = vmatpush1.msra.mxu0 0.0
        %314 = vmatprep.subr.mxu0 0.0
        %315 = vmatpush1.msra.mxu0 0.0
        %316 = vmatprep.subr.mxu0 0.0
        %317 = vmatpush1.msra.mxu0 0.0
        %318 = vmatprep.subr.mxu0 0.0
        %319 = vmatpush1.msra.mxu0 0.0
        %320 = vmatprep.subr.mxu0 0.0
        %321 = vmatpush1.msra.mxu0 0.0
        %322 = vmatprep.subr.mxu0 0.0
        %323 = vmatpush1.msra.mxu0 0.0
        %324 = vmatprep.subr.mxu0 0.0
        %325 = vmatpush1.msra.mxu0 0.0
        %326 = vmatprep.subr.mxu0 0.0
        %327 = vmatpush1.msra.mxu0 0.0
        %328 = vmatprep.subr.mxu0 0.0
        %329 = vmatpush1.msra.mxu0 0.0
        %330 = vmatprep.subr.mxu0 0.0
        %331 = vmatpush1.msra.mxu0 0.0
        %332 = vmatprep.subr.mxu0 0.0
        %333 = vmatpush1.msra.mxu0 0.0
        %334 = vmatprep.mubr.f32.mxu0 0.0
        %335 = vmatmul.mubr.f32.gmra.mrb[0].mxu0 %v268
        %v336 = vpop.f32.mrb[0].mxu0
        %v337 = vadd.f32 0.0, %v336
        %v338 = vpop.f32.mrb[0].mxu0
        %v339 = vadd.f32 0.0, %v338
        %340 = vdwg.mxu0
        %341 = vmatprep.subr.mxu0 %v264
        %342 = vmatpush1.msra.mxu0 %v263
        %343 = vmatprep.subr.mxu0 0.0
        %344 = vmatpush1.msra.mxu0 0.0
        %345 = vmatprep.subr.mxu0 0.0
        %346 = vmatpush1.msra.mxu0 0.0
        %347 = vmatprep.subr.mxu0 0.0
        %348 = vmatpush1.msra.mxu0 0.0
        %349 = vmatprep.subr.mxu0 0.0
        %350 = vmatpush1.msra.mxu0 0.0
        %351 = vmatprep.subr.mxu0 0.0
        %352 = vmatpush1.msra.mxu0 0.0
        %353 = vmatprep.subr.mxu0 0.0
        %354 = vmatpush1.msra.mxu0 0.0
        %355 = vmatprep.subr.mxu0 0.0
        %356 = vmatpush1.msra.mxu0 0.0
        %357 = vmatprep.subr.mxu0 0.0
        %358 = vmatpush1.msra.mxu0 0.0
        %359 = vmatprep.subr.mxu0 0.0
        %360 = vmatpush1.msra.mxu0 0.0
        %361 = vmatprep.subr.mxu0 0.0
        %362 = vmatpush1.msra.mxu0 0.0
        %363 = vmatprep.subr.mxu0 0.0
        %364 = vmatpush1.msra.mxu0 0.0
        %365 = vmatprep.subr.mxu0 0.0
        %366 = vmatpush1.msra.mxu0 0.0
        %367 = vmatprep.subr.mxu0 0.0
        %368 = vmatpush1.msra.mxu0 0.0
        %369 = vmatprep.subr.mxu0 0.0
        %370 = vmatpush1.msra.mxu0 0.0
        %371 = vmatprep.subr.mxu0 0.0
        %372 = vmatpush1.msra.mxu0 0.0
        %373 = vmatprep.subr.mxu0 0.0
        %374 = vmatpush1.msra.mxu0 0.0
        %375 = vmatprep.subr.mxu0 0.0
        %376 = vmatpush1.msra.mxu0 0.0
        %377 = vmatprep.subr.mxu0 0.0
        %378 = vmatpush1.msra.mxu0 0.0
        %379 = vmatprep.subr.mxu0 0.0
        %380 = vmatpush1.msra.mxu0 0.0
        %381 = vmatprep.subr.mxu0 0.0
        %382 = vmatpush1.msra.mxu0 0.0
        %383 = vmatprep.subr.mxu0 0.0
        %384 = vmatpush1.msra.mxu0 0.0
        %385 = vmatprep.subr.mxu0 0.0
        %386 = vmatpush1.msra.mxu0 0.0
        %387 = vmatprep.subr.mxu0 0.0
        %388 = vmatpush1.msra.mxu0 0.0
        %389 = vmatprep.subr.mxu0 0.0
        %390 = vmatpush1.msra.mxu0 0.0
        %391 = vmatprep.subr.mxu0 0.0
        %392 = vmatpush1.msra.mxu0 0.0
        %393 = vmatprep.subr.mxu0 0.0
        %394 = vmatpush1.msra.mxu0 0.0
        %395 = vmatprep.subr.mxu0 0.0
        %396 = vmatpush1.msra.mxu0 0.0
        %397 = vmatprep.subr.mxu0 0.0
        %398 = vmatpush1.msra.mxu0 0.0
        %399 = vmatprep.subr.mxu0 0.0
        %400 = vmatpush1.msra.mxu0 0.0
        %401 = vmatprep.subr.mxu0 0.0
        %402 = vmatpush1.msra.mxu0 0.0
        %403 = vmatprep.subr.mxu0 0.0
        %404 = vmatpush1.msra.mxu0 0.0
        %405 = vmatprep.mubr.f32.mxu0 0.0
        %406 = vmatmul.mubr.f32.gmra.mrb[0].mxu0 %v268
        %v407 = vpop.f32.mrb[0].mxu0
        %v408 = vadd.f32 0.0, %v407
        %v409 = vpop.f32.mrb[0].mxu0
        %v410 = vadd.f32 0.0, %v409
        %411 = vdwg.mxu0
        %v412 = vld [vmem:[#allocation7] sm:$0xff]
        %v413 = vld [vmem:[#allocation7 + $0x8] sm:$0xff]
        %v414 = vld [vmem:[#allocation7 + $0x10] sm:$0xff]
        %v415 = vld [vmem:[#allocation7 + $0x18] sm:$0xff]
        %v416 = vld [vmem:[#allocation7 + $0x20] sm:$0xff]
        %v417 = vld [vmem:[#allocation7 + $0x28] sm:$0xff]
        %v418 = vld [vmem:[#allocation7 + $0x30] sm:$0xff]
        %v419 = vld [vmem:[#allocation7 + $0x38] sm:$0xff]
        %v420 = vld [vmem:[#allocation7 + $0x40] sm:$0xff]
        %v421 = vld [vmem:[#allocation7 + $0x48] sm:$0xff]
        %v422 = vld [vmem:[#allocation7 + $0x50] sm:$0xff]
        %v423 = vld [vmem:[#allocation7 + $0x58] sm:$0xff]
        %v424 = vld [vmem:[#allocation7 + $0x60] sm:$0xff]
        %v425 = vld [vmem:[#allocation7 + $0x68] sm:$0xff]
        %v426 = vld [vmem:[#allocation7 + $0x70] sm:$0xff]
        %v427 = vld [vmem:[#allocation7 + $0x78] sm:$0xff]
        %v428 = vld [vmem:[%s3] sm:$0x1]
        %v430 = vlaneseq
        %v431 = vshrl.u32 %v430, 7
        %v432 = vsub.s32 0, %v431
        %v433 = vrot.slane %v428, %v432
        %435 = vmatprep.subr.mxu0 0.0
        %436 = vmatpush1.msra.mxu0 %v412
        %437 = vmatprep.subr.mxu0 0.0
        %438 = vmatpush1.msra.mxu0 %v413
        %439 = vmatprep.subr.mxu0 0.0
        %440 = vmatpush1.msra.mxu0 %v414
        %441 = vmatprep.subr.mxu0 0.0
        %442 = vmatpush1.msra.mxu0 %v415
        %443 = vmatprep.subr.mxu0 0.0
        %444 = vmatpush1.msra.mxu0 %v416
        %445 = vmatprep.subr.mxu0 0.0
        %446 = vmatpush1.msra.mxu0 %v417
        %447 = vmatprep.subr.mxu0 0.0
        %448 = vmatpush1.msra.mxu0 %v418
        %449 = vmatprep.subr.mxu0 0.0
        %450 = vmatpush1.msra.mxu0 %v419
        %451 = vmatprep.subr.mxu0 0.0
        %452 = vmatpush1.msra.mxu0 %v420
        %453 = vmatprep.subr.mxu0 0.0
        %454 = vmatpush1.msra.mxu0 %v421
        %455 = vmatprep.subr.mxu0 0.0
        %456 = vmatpush1.msra.mxu0 %v422
        %457 = vmatprep.subr.mxu0 0.0
        %458 = vmatpush1.msra.mxu0 %v423
        %459 = vmatprep.subr.mxu0 0.0
        %460 = vmatpush1.msra.mxu0 %v424
        %461 = vmatprep.subr.mxu0 0.0
        %462 = vmatpush1.msra.mxu0 %v425
        %463 = vmatprep.subr.mxu0 0.0
        %464 = vmatpush1.msra.mxu0 %v426
        %465 = vmatprep.subr.mxu0 0.0
        %466 = vmatpush1.msra.mxu0 %v427
        %467 = vmatprep.subr.mxu0 0.0
        %468 = vmatpush1.msra.mxu0 0.0
        %469 = vmatprep.subr.mxu0 0.0
        %470 = vmatpush1.msra.mxu0 0.0
        %471 = vmatprep.subr.mxu0 0.0
        %472 = vmatpush1.msra.mxu0 0.0
        %473 = vmatprep.subr.mxu0 0.0
        %474 = vmatpush1.msra.mxu0 0.0
        %475 = vmatprep.subr.mxu0 0.0
        %476 = vmatpush1.msra.mxu0 0.0
        %477 = vmatprep.subr.mxu0 0.0
        %478 = vmatpush1.msra.mxu0 0.0
        %479 = vmatprep.subr.mxu0 0.0
        %480 = vmatpush1.msra.mxu0 0.0
        %481 = vmatprep.subr.mxu0 0.0
        %482 = vmatpush1.msra.mxu0 0.0
        %483 = vmatprep.subr.mxu0 0.0
        %484 = vmatpush1.msra.mxu0 0.0
        %485 = vmatprep.subr.mxu0 0.0
        %486 = vmatpush1.msra.mxu0 0.0
        %487 = vmatprep.subr.mxu0 0.0
        %488 = vmatpush1.msra.mxu0 0.0
        %489 = vmatprep.subr.mxu0 0.0
        %490 = vmatpush1.msra.mxu0 0.0
        %491 = vmatprep.subr.mxu0 0.0
        %492 = vmatpush1.msra.mxu0 0.0
        %493 = vmatprep.subr.mxu0 0.0
        %494 = vmatpush1.msra.mxu0 0.0
        %495 = vmatprep.subr.mxu0 0.0
        %496 = vmatpush1.msra.mxu0 0.0
        %497 = vmatprep.subr.mxu0 0.0
        %498 = vmatpush1.msra.mxu0 0.0
        %499 = vmatprep.mubr.f32.mxu0 0.0
        %500 = vmatmul.mubr.f32.gmra.mrb[0].mxu0 %v337
        %v501 = vpop.f32.mrb[0].mxu0
        %v502 = vadd.f32 %v433, %v501
        %v503 = vpop.f32.mrb[0].mxu0
        %504 = vdwg.mxu0
        %v505 = vmax.f32 %v502, 0.0
        %506 = vst [vmem:[%s258] sm:$0xff] %v505
        %v507 = vld [vmem:[%s3 + $0x1] sm:$0x1]
        %v509 = vlaneseq
        %v510 = vshrl.u32 %v509, 7
        %v511 = vsub.s32 0, %v510
        %v512 = vrot.slane %v507, %v511
        %514 = vmatprep.subr.mxu0 0.0
        %515 = vmatpush1.msra.mxu0 %v412
        %516 = vmatprep.subr.mxu0 0.0
        %517 = vmatpush1.msra.mxu0 %v413
        %518 = vmatprep.subr.mxu0 0.0
        %519 = vmatpush1.msra.mxu0 %v414
        %520 = vmatprep.subr.mxu0 0.0
        %521 = vmatpush1.msra.mxu0 %v415
        %522 = vmatprep.subr.mxu0 0.0
        %523 = vmatpush1.msra.mxu0 %v416
        %524 = vmatprep.subr.mxu0 0.0
        %525 = vmatpush1.msra.mxu0 %v417
        %526 = vmatprep.subr.mxu0 0.0
        %527 = vmatpush1.msra.mxu0 %v418
        %528 = vmatprep.subr.mxu0 0.0
        %529 = vmatpush1.msra.mxu0 %v419
        %530 = vmatprep.subr.mxu0 0.0
        %531 = vmatpush1.msra.mxu0 %v420
        %532 = vmatprep.subr.mxu0 0.0
        %533 = vmatpush1.msra.mxu0 %v421
        %534 = vmatprep.subr.mxu0 0.0
        %535 = vmatpush1.msra.mxu0 %v422
        %536 = vmatprep.subr.mxu0 0.0
        %537 = vmatpush1.msra.mxu0 %v423
        %538 = vmatprep.subr.mxu0 0.0
        %539 = vmatpush1.msra.mxu0 %v424
        %540 = vmatprep.subr.mxu0 0.0
        %541 = vmatpush1.msra.mxu0 %v425
        %542 = vmatprep.subr.mxu0 0.0
        %543 = vmatpush1.msra.mxu0 %v426
        %544 = vmatprep.subr.mxu0 0.0
        %545 = vmatpush1.msra.mxu0 %v427
        %546 = vmatprep.subr.mxu0 0.0
        %547 = vmatpush1.msra.mxu0 0.0
        %548 = vmatprep.subr.mxu0 0.0
        %549 = vmatpush1.msra.mxu0 0.0
        %550 = vmatprep.subr.mxu0 0.0
        %551 = vmatpush1.msra.mxu0 0.0
        %552 = vmatprep.subr.mxu0 0.0
        %553 = vmatpush1.msra.mxu0 0.0
        %554 = vmatprep.subr.mxu0 0.0
        %555 = vmatpush1.msra.mxu0 0.0
        %556 = vmatprep.subr.mxu0 0.0
        %557 = vmatpush1.msra.mxu0 0.0
        %558 = vmatprep.subr.mxu0 0.0
        %559 = vmatpush1.msra.mxu0 0.0
        %560 = vmatprep.subr.mxu0 0.0
        %561 = vmatpush1.msra.mxu0 0.0
        %562 = vmatprep.subr.mxu0 0.0
        %563 = vmatpush1.msra.mxu0 0.0
        %564 = vmatprep.subr.mxu0 0.0
        %565 = vmatpush1.msra.mxu0 0.0
        %566 = vmatprep.subr.mxu0 0.0
        %567 = vmatpush1.msra.mxu0 0.0
        %568 = vmatprep.subr.mxu0 0.0
        %569 = vmatpush1.msra.mxu0 0.0
        %570 = vmatprep.subr.mxu0 0.0
        %571 = vmatpush1.msra.mxu0 0.0
        %572 = vmatprep.subr.mxu0 0.0
        %573 = vmatpush1.msra.mxu0 0.0
        %574 = vmatprep.subr.mxu0 0.0
        %575 = vmatpush1.msra.mxu0 0.0
        %576 = vmatprep.subr.mxu0 0.0
        %577 = vmatpush1.msra.mxu0 0.0
        %578 = vmatprep.mubr.f32.mxu0 0.0
        %579 = vmatmul.mubr.f32.gmra.mrb[0].mxu0 %v339
        %v580 = vpop.f32.mrb[0].mxu0
        %v581 = vadd.f32 %v512, %v580
        %v582 = vpop.f32.mrb[0].mxu0
        %583 = vdwg.mxu0
        %v584 = vmax.f32 %v581, 0.0
        %585 = vst [vmem:[%s258 + $0x8] sm:$0xff] %v584
        %v586 = vld [vmem:[%s3 + $0x2] sm:$0x1]
        %v588 = vlaneseq
        %v589 = vshrl.u32 %v588, 7
        %v590 = vsub.s32 0, %v589
        %v591 = vrot.slane %v586, %v590
        %593 = vmatprep.subr.mxu0 0.0
        %594 = vmatpush1.msra.mxu0 %v412
        %595 = vmatprep.subr.mxu0 0.0
        %596 = vmatpush1.msra.mxu0 %v413
        %597 = vmatprep.subr.mxu0 0.0
        %598 = vmatpush1.msra.mxu0 %v414
        %599 = vmatprep.subr.mxu0 0.0
        %600 = vmatpush1.msra.mxu0 %v415
        %601 = vmatprep.subr.mxu0 0.0
        %602 = vmatpush1.msra.mxu0 %v416
        %603 = vmatprep.subr.mxu0 0.0
        %604 = vmatpush1.msra.mxu0 %v417
        %605 = vmatprep.subr.mxu0 0.0
        %606 = vmatpush1.msra.mxu0 %v418
        %607 = vmatprep.subr.mxu0 0.0
        %608 = vmatpush1.msra.mxu0 %v419
        %609 = vmatprep.subr.mxu0 0.0
        %610 = vmatpush1.msra.mxu0 %v420
        %611 = vmatprep.subr.mxu0 0.0
        %612 = vmatpush1.msra.mxu0 %v421
        %613 = vmatprep.subr.mxu0 0.0
        %614 = vmatpush1.msra.mxu0 %v422
        %615 = vmatprep.subr.mxu0 0.0
        %616 = vmatpush1.msra.mxu0 %v423
        %617 = vmatprep.subr.mxu0 0.0
        %618 = vmatpush1.msra.mxu0 %v424
        %619 = vmatprep.subr.mxu0 0.0
        %620 = vmatpush1.msra.mxu0 %v425
        %621 = vmatprep.subr.mxu0 0.0
        %622 = vmatpush1.msra.mxu0 %v426
        %623 = vmatprep.subr.mxu0 0.0
        %624 = vmatpush1.msra.mxu0 %v427
        %625 = vmatprep.subr.mxu0 0.0
        %626 = vmatpush1.msra.mxu0 0.0
        %627 = vmatprep.subr.mxu0 0.0
        %628 = vmatpush1.msra.mxu0 0.0
        %629 = vmatprep.subr.mxu0 0.0
        %630 = vmatpush1.msra.mxu0 0.0
        %631 = vmatprep.subr.mxu0 0.0
        %632 = vmatpush1.msra.mxu0 0.0
        %633 = vmatprep.subr.mxu0 0.0
        %634 = vmatpush1.msra.mxu0 0.0
        %635 = vmatprep.subr.mxu0 0.0
        %636 = vmatpush1.msra.mxu0 0.0
        %637 = vmatprep.subr.mxu0 0.0
        %638 = vmatpush1.msra.mxu0 0.0
        %639 = vmatprep.subr.mxu0 0.0
        %640 = vmatpush1.msra.mxu0 0.0
        %641 = vmatprep.subr.mxu0 0.0
        %642 = vmatpush1.msra.mxu0 0.0
        %643 = vmatprep.subr.mxu0 0.0
        %644 = vmatpush1.msra.mxu0 0.0
        %645 = vmatprep.subr.mxu0 0.0
        %646 = vmatpush1.msra.mxu0 0.0
        %647 = vmatprep.subr.mxu0 0.0
        %648 = vmatpush1.msra.mxu0 0.0
        %649 = vmatprep.subr.mxu0 0.0
        %650 = vmatpush1.msra.mxu0 0.0
        %651 = vmatprep.subr.mxu0 0.0
        %652 = vmatpush1.msra.mxu0 0.0
        %653 = vmatprep.subr.mxu0 0.0
        %654 = vmatpush1.msra.mxu0 0.0
        %655 = vmatprep.subr.mxu0 0.0
        %656 = vmatpush1.msra.mxu0 0.0
        %657 = vmatprep.mubr.f32.mxu0 0.0
        %658 = vmatmul.mubr.f32.gmra.mrb[0].mxu0 %v408
        %v659 = vpop.f32.mrb[0].mxu0
        %v660 = vadd.f32 %v591, %v659
        %v661 = vpop.f32.mrb[0].mxu0
        %662 = vdwg.mxu0
        %v663 = vmax.f32 %v660, 0.0
        %664 = vst [vmem:[%s258 + $0x10] sm:$0xff] %v663
        %v665 = vld [vmem:[%s3 + $0x3] sm:$0x1]
        %v667 = vlaneseq
        %v668 = vshrl.u32 %v667, 7
        %v669 = vsub.s32 0, %v668
        %v670 = vrot.slane %v665, %v669
        %672 = vmatprep.subr.mxu0 0.0
        %673 = vmatpush1.msra.mxu0 %v412
        %674 = vmatprep.subr.mxu0 0.0
        %675 = vmatpush1.msra.mxu0 %v413
        %676 = vmatprep.subr.mxu0 0.0
        %677 = vmatpush1.msra.mxu0 %v414
        %678 = vmatprep.subr.mxu0 0.0
        %679 = vmatpush1.msra.mxu0 %v415
        %680 = vmatprep.subr.mxu0 0.0
        %681 = vmatpush1.msra.mxu0 %v416
        %682 = vmatprep.subr.mxu0 0.0
        %683 = vmatpush1.msra.mxu0 %v417
        %684 = vmatprep.subr.mxu0 0.0
        %685 = vmatpush1.msra.mxu0 %v418
        %686 = vmatprep.subr.mxu0 0.0
        %687 = vmatpush1.msra.mxu0 %v419
        %688 = vmatprep.subr.mxu0 0.0
        %689 = vmatpush1.msra.mxu0 %v420
        %690 = vmatprep.subr.mxu0 0.0
        %691 = vmatpush1.msra.mxu0 %v421
        %692 = vmatprep.subr.mxu0 0.0
        %693 = vmatpush1.msra.mxu0 %v422
        %694 = vmatprep.subr.mxu0 0.0
        %695 = vmatpush1.msra.mxu0 %v423
        %696 = vmatprep.subr.mxu0 0.0
        %697 = vmatpush1.msra.mxu0 %v424
        %698 = vmatprep.subr.mxu0 0.0
        %699 = vmatpush1.msra.mxu0 %v425
        %700 = vmatprep.subr.mxu0 0.0
        %701 = vmatpush1.msra.mxu0 %v426
        %702 = vmatprep.subr.mxu0 0.0
        %703 = vmatpush1.msra.mxu0 %v427
        %704 = vmatprep.subr.mxu0 0.0
        %705 = vmatpush1.msra.mxu0 0.0
        %706 = vmatprep.subr.mxu0 0.0
        %707 = vmatpush1.msra.mxu0 0.0
        %708 = vmatprep.subr.mxu0 0.0
        %709 = vmatpush1.msra.mxu0 0.0
        %710 = vmatprep.subr.mxu0 0.0
        %711 = vmatpush1.msra.mxu0 0.0
        %712 = vmatprep.subr.mxu0 0.0
        %713 = vmatpush1.msra.mxu0 0.0
        %714 = vmatprep.subr.mxu0 0.0
        %715 = vmatpush1.msra.mxu0 0.0
        %716 = vmatprep.subr.mxu0 0.0
        %717 = vmatpush1.msra.mxu0 0.0
        %718 = vmatprep.subr.mxu0 0.0
        %719 = vmatpush1.msra.mxu0 0.0
        %720 = vmatprep.subr.mxu0 0.0
        %721 = vmatpush1.msra.mxu0 0.0
        %722 = vmatprep.subr.mxu0 0.0
        %723 = vmatpush1.msra.mxu0 0.0
        %724 = vmatprep.subr.mxu0 0.0
        %725 = vmatpush1.msra.mxu0 0.0
        %726 = vmatprep.subr.mxu0 0.0
        %727 = vmatpush1.msra.mxu0 0.0
        %728 = vmatprep.subr.mxu0 0.0
        %729 = vmatpush1.msra.mxu0 0.0
        %730 = vmatprep.subr.mxu0 0.0
        %731 = vmatpush1.msra.mxu0 0.0
        %732 = vmatprep.subr.mxu0 0.0
        %733 = vmatpush1.msra.mxu0 0.0
        %734 = vmatprep.subr.mxu0 0.0
        %735 = vmatpush1.msra.mxu0 0.0
        %736 = vmatprep.mubr.f32.mxu0 0.0
        %737 = vmatmul.mubr.f32.gmra.mrb[0].mxu0 %v410
        %v738 = vpop.f32.mrb[0].mxu0
        %v739 = vadd.f32 %v670, %v738
        %v740 = vpop.f32.mrb[0].mxu0
        %741 = vdwg.mxu0
        %v742 = vmax.f32 %v739, 0.0
        %743 = vst [vmem:[%s258 + $0x18] sm:$0xff] %v742
        %s744 = sand.u32 %s135, 1
        %s745 = scalar_lea.sflag [#allocation4], %s744
        %s746 = sand.u32 %s135, 1
        %s747 = smul.addr %s746, 32
        %s748 = scalar_lea.vmem [#allocation8], %s747
        // Predicated region
        $region49: #{tpu_custom_call.1} parent=35 // pred_check
          %p749 = pneg %p145
        $region50: #{tpu_custom_call.1} parent=35 // pred_check_branch
          %751 = sbr.rel (%p749) target = $region52
        $region51: #{tpu_custom_call.1} parent=35 // pred_region
          %s752 = smul.u32 4, %s27
          %s754 = ssub.s32 512, 512
          %755 = vsyncadd %s745, %s754
          %s756 = smul.addr %s26, 4
          %s757 = sadd.s32 %s752, %s756
          %s758 = smul.addr %s757, 128
          %s759 = scalar_lea.hbm %s4, %s758
          %s761 = sshll.u32 %s748, 4
          %s762 = int_to_ptr.vmem [resolvable:$true] %s761
          %764 = dma.vmem_to_hbm [thread:$0]  %s762, 512, %s759, %s745
        $region52: #{tpu_custom_call.1} parent=35 // pred_fallthru
          _
      $region36: #{tpu_custom_call.1} parent=5 // pred_fallthru
        _
      %p765 = scmp.le.s32.totalorder 2, %s17
      // Predicated region
      $region53: #{tpu_custom_call.1} parent=5 // pred_check
        %p766 = pneg %p765
      $region54: #{tpu_custom_call.1} parent=5 // pred_check_branch
        %768 = sbr.rel (%p766) target = $region56
      $region55: #{tpu_custom_call.1} parent=5 // pred_region
        %s769 = ssub.s32 %s17, 2
        // Predicated region
        $region57: #{tpu_custom_call.1} parent=55 // pred_check
          %p770 = pneg %p151
        $region58: #{tpu_custom_call.1} parent=55 // pred_check_branch
          %772 = sbr.rel (%p770) target = $region60
        $region59: #{tpu_custom_call.1} parent=55 // pred_region
          %s773 = sand.u32 %s136, 1
          %s774 = scalar_lea.sflag [#allocation4], %s773
          %s775 = sand.u32 %s136, 1
          %s776 = smul.addr %s775, 32
          %s777 = scalar_lea.vmem [#allocation8], %s776
          %778 = dma.done %s774, 512
        $region60: #{tpu_custom_call.1} parent=55 // pred_fallthru
          _
      $region56: #{tpu_custom_call.1} parent=5 // pred_fallthru
        _
    $region6: #{tpu_custom_call.1} parent=1 // loop_footer
      %s21 = sadd.s32 1, %s17
    $region7: #{tpu_custom_call.1} parent=1 // loop_footer_branch
      %16 = sbr.rel target = $region3
    $region8: #{tpu_custom_call.1} parent=1 // loop_exit
      _
    %779 = vsyncpa [#allocation3], 1
    %s780 = scalar_lea.sflag [#allocation3], 1
    %781 = vsyncpa %s780, 1
    %782 = vsyncpa [#allocation6], 1
    %783 = vsyncpa [#allocation4], 1
    %s784 = scalar_lea.sflag [#allocation4], 1
    %785 = vsyncpa %s784, 1

</llo_original>
